<compile_context>
chip_gen: v7x
topology: tpu7x:2x2x1
jax: 0.10.0
libtpu: 0.0.40
codegen_flags: <defaults>
</compile_context>

<pallas_src>
import math

import jax
import jax.numpy as jnp
from jax.experimental import pallas as pl
from jax.experimental.pallas import tpu as pltpu


_LANE = 128                       # TPU lane width
_BLOCK_BYTES = 2 << 20            # per-block budget; in+out double-buffered ≈ 8 MiB live
_VMEM_LIMIT = 32 << 20            # explicit scoped-VMEM limit (safe on v5e/v6e/v7x)
_GENERAL_FALLBACK_MAX_BYTES = 2 << 20


# ---------------------------------------------------------------------------
# Permutation coalescing
# ---------------------------------------------------------------------------

def _coalesce(shape, dims):
    """Merge input axes that stay adjacent & in-order across the permutation."""
    groups = []
    for d in dims:
        if groups and groups[-1][-1] + 1 == d:
            groups[-1].append(d)
        else:
            groups.append([d])
    in_order = sorted(range(len(groups)), key=lambda i: groups[i][0])
    in_shape = tuple(math.prod(shape[a] for a in groups[i]) for i in in_order)
    pos = {g: p for p, g in enumerate(in_order)}
    perm = tuple(pos[k] for k in range(len(groups)))
    return in_shape, perm


# ---------------------------------------------------------------------------
# Batched-transpose kernels
# ---------------------------------------------------------------------------

def _transpose2d_kernel(x_ref, o_ref):
    # x_ref: (TR, TS) tile; o_ref: (TS, TR) tile. 2-D transpose on the XLU.
    o_ref[...] = x_ref[...].T


def _transpose3d_kernel(x_ref, o_ref):
    # x_ref: (TB, R, S); o_ref: (TB, S, R). Batched minor-dim transpose; used on
    # tiny inputs where several batch entries fit one block.
    o_ref[...] = jnp.swapaxes(x_ref[...], 1, 2)


def _choose_tiles(b, r, s, itemsize):
    """Pick (tb, tr, ts) so one axis is full-extent and blocks fit _BLOCK_BYTES."""
    budget = _BLOCK_BYTES // itemsize

    # Tiny-input path: whole (R, S) slab fits -> batch multiple B per block,
    # but keep >=2 grid steps so v7x's two TensorCores both get work.
    if r * s <= budget:
        tb = max(1, min(b, budget // (r * s)))
        if b > 1:
            tb = min(tb, -(-b // 2))        # ceil(b / 2)
        return tb, r, s

    # Prefer full-extent S: input-side DMA rows are fully contiguous; tr is a
    # multiple of 128 so the transposed output block stays lane-dense.
    tr = (budget // s) // _LANE * _LANE
    if tr >= _LANE:
        return 1, min(tr, r), s

    # Otherwise full-extent R: output-side DMA rows are fully contiguous.
    ts = (budget // r) // _LANE * _LANE
    if ts >= _LANE:
        return 1, r, min(ts, s)

    # Both dims huge: square-ish 128-multiple tiles.
    t = max(_LANE, int(math.sqrt(budget)) // _LANE * _LANE)
    return 1, min(t, r), min(t, s)


def _batched_transpose(x3):
    """(B, R, S) -> (B, S, R), tiled, all-parallel grid, R-tiles innermost."""
    b, r, s = x3.shape
    tb, tr, ts = _choose_tiles(b, r, s, x3.dtype.itemsize)
    grid = (pl.cdiv(b, tb), pl.cdiv(s, ts), pl.cdiv(r, tr))

    if tb == 1:
        kernel = _transpose2d_kernel
        in_spec = pl.BlockSpec((None, tr, ts), lambda bi, j, i: (bi, i, j))
        out_spec = pl.BlockSpec((None, ts, tr), lambda bi, j, i: (bi, j, i))
    else:
        kernel = _transpose3d_kernel
        in_spec = pl.BlockSpec((tb, tr, ts), lambda bi, j, i: (bi, i, j))
        out_spec = pl.BlockSpec((tb, ts, tr), lambda bi, j, i: (bi, j, i))

    return pl.pallas_call(
        kernel,
        out_shape=jax.ShapeDtypeStruct((b, s, r), x3.dtype),
        grid=grid,
        in_specs=[in_spec],
        out_specs=out_spec,
        compiler_params=pltpu.CompilerParams(
            dimension_semantics=("parallel", "parallel", "parallel"),
            vmem_limit_bytes=_VMEM_LIMIT),
    )(x3)


# ---------------------------------------------------------------------------
# Public entry point: PermuteLayer
# ---------------------------------------------------------------------------

def permute_layer(x, dims):
    """Pallas equivalent of torch PermuteLayer(dims): returns x.permute(*dims)."""
    dims = tuple(int(d) % x.ndim for d in dims)
    if sorted(dims) != list(range(x.ndim)):
        raise ValueError(f"dims {dims} is not a permutation of {x.ndim} axes")
    out_shape_full = tuple(x.shape[d] for d in dims)

    in_shape_c, perm = _coalesce(x.shape, dims)
    n = len(perm)

    if perm == tuple(range(n)):
        # Identity after coalescing: metadata only, no HBM round trip.
        return x.reshape(out_shape_full)

    xc = x.reshape(in_shape_c)  # metadata-only reshape

    if n >= 2 and perm == tuple(range(n - 2)) + (n - 1, n - 2):
        # Leading dims untouched, last two swapped -> tiled batched transpose.
        lead = in_shape_c[:-2]
        b = math.prod(lead) if lead else 1
        r, s = in_shape_c[-2], in_shape_c[-1]
        y3 = _batched_transpose(xc.reshape(b, r, s))
        return y3.reshape(out_shape_full)

    # General fallback (never reached by the module's (0,2,1)/(0,2,3,1) permutes):
    # single-block whole-array transpose, guarded to small arrays.
    # TODO(synk): tile the general-permutation path instead of one VMEM block.
    nbytes = x.size * x.dtype.itemsize
    if nbytes > _GENERAL_FALLBACK_MAX_BYTES:
        raise NotImplementedError(
            f"general permutation {dims} only supported up to "
            f"{_GENERAL_FALLBACK_MAX_BYTES} bytes (got {nbytes})")

    def _gen_kernel(x_ref, o_ref):
        o_ref[...] = jnp.transpose(x_ref[...], perm)

    y = pl.pallas_call(
        _gen_kernel,
        out_shape=jax.ShapeDtypeStruct(tuple(in_shape_c[p] for p in perm),
                                       x.dtype),
        compiler_params=pltpu.CompilerParams(vmem_limit_bytes=_VMEM_LIMIT),
    )(xc)
    return y.reshape(out_shape_full)


# ---------------------------------------------------------------------------
# Fused PermuteLayer((0,2,1)) + Conv1d(kernel_size=1)  (review's #1 change)
# ---------------------------------------------------------------------------

def _fused_permute_conv1x1_kernel(x_ref, w_ref, b_ref, o_ref):
    # x_ref: (T, D), w_ref: (C, D), b_ref: (C, 1), o_ref: (C, T).
    # The permute never exists: dot_general contracts D on both operands and the
    # MXU consumes the (T, D) orientation for free.
    acc = jax.lax.dot_general(
        w_ref[...], x_ref[...],
        dimension_numbers=(((1,), (1,)), ((), ())),
        preferred_element_type=jnp.float32)
    o_ref[...] = (acc + b_ref[...]).astype(o_ref.dtype)


def fused_permute_conv1x1(x_btd, weight_cd, bias_c):
    """(B, T, D) -> (B, C, T) == Conv1d(k=1)(permute(0,2,1)(x)), fused."""
    b, t, d = x_btd.shape
    c = weight_cd.shape[0]
    bias2 = bias_c.reshape(c, 1)
    return pl.pallas_call(
        _fused_permute_conv1x1_kernel,
        out_shape=jax.ShapeDtypeStruct((b, c, t), x_btd.dtype),
        grid=(b,),
        in_specs=[
            pl.BlockSpec((None, t, d), lambda bi: (bi, 0, 0)),
            pl.BlockSpec((c, d), lambda bi: (0, 0)),
            pl.BlockSpec((c, 1), lambda bi: (0, 0)),
        ],
        out_specs=pl.BlockSpec((None, c, t), lambda bi: (bi, 0, 0)),
        compiler_params=pltpu.CompilerParams(
            dimension_semantics=("parallel",),
            vmem_limit_bytes=_VMEM_LIMIT),
    )(x_btd, weight_cd, bias2)


# ---------------------------------------------------------------------------
# Tests
# ---------------------------------------------------------------------------

if __name__ == "__main__":
    keys = jax.random.split(jax.random.PRNGKey(0), 8)

    # 1) Module-consistent case: ConvolutionModule's PermuteLayer(dims=(0,2,1))
    #    on (batch=2, seq=16, d_encoder=32).
    x1 = jax.random.normal(keys[0], (2, 16, 32), dtype=jnp.float32)
    y1 = jax.block_until_ready(permute_layer(x1, (0, 2, 1)))
    r1 = jnp.transpose(x1, (0, 2, 1))
    assert y1.shape == r1.shape and y1.dtype == r1.dtype
    assert bool(jnp.array_equal(y1, r1)), "permute (0,2,1) mismatch"

    # 2) NCHW -> NHWC style permute (coalesces to the same batched transpose).
    x2 = jax.random.normal(keys[1], (2, 8, 16, 16), dtype=jnp.float32)
    y2 = jax.block_until_ready(permute_layer(x2, (0, 2, 3, 1)))
    r2 = jnp.transpose(x2, (0, 2, 3, 1))
    assert y2.shape == r2.shape and bool(jnp.array_equal(y2, r2)), \
        "permute (0,2,3,1) mismatch"

    # 3) Tiny B=4 case: exercises the batched (tb>1) 3-D block path.
    x3 = jax.random.normal(keys[2], (4, 8, 24), dtype=jnp.float32)
    y3 = jax.block_until_ready(permute_layer(x3, (0, 2, 1)))
    assert bool(jnp.array_equal(y3, jnp.transpose(x3, (0, 2, 1)))), \
        "batched-block permute mismatch"

    # 4) Larger case: whole per-batch slab block, grid (2,1,1).
    x4 = jax.random.normal(keys[3], (2, 1024, 512), dtype=jnp.float32)
    y4 = jax.block_until_ready(permute_layer(x4, (0, 2, 1)))
    assert bool(jnp.array_equal(y4, jnp.transpose(x4, (0, 2, 1)))), \
        "tiled permute (0,2,1) mismatch (full-slab)"

    # 5) Ragged R tiles (full-S path, R % tr != 0).
    x5 = jax.random.normal(keys[4], (1, 640, 2048), dtype=jnp.float32)
    y5 = jax.block_until_ready(permute_layer(x5, (0, 2, 1)))
    assert bool(jnp.array_equal(y5, jnp.transpose(x5, (0, 2, 1)))), \
        "tiled permute mismatch (ragged R)"

    # 6) Ragged S tiles (full-R path, S % ts != 0).
    x6 = jax.random.normal(keys[5], (1, 160, 4608), dtype=jnp.float32)
    y6 = jax.block_until_ready(permute_layer(x6, (0, 2, 1)))
    assert bool(jnp.array_equal(y6, jnp.transpose(x6, (0, 2, 1)))), \
        "tiled permute mismatch (ragged S)"

    # 7) Fused permute + 1x1 conv (d_encoder=32, expansion=64): the permute is
    #    never materialized in HBM.
    w = jax.random.normal(keys[6], (64, 32), dtype=jnp.float32) * 0.1
    bias = jax.random.normal(keys[7], (64,), dtype=jnp.float32) * 0.1
    yf = jax.block_until_ready(fused_permute_conv1x1(x1, w, bias))
    rf = jnp.einsum("btd,cd->bct", x1, w) + bias[None, :, None]
    assert yf.shape == rf.shape
    assert bool(jnp.allclose(yf, rf, rtol=1e-5, atol=1e-5)), \
        "fused permute+conv1x1 mismatch"

    print("KERNEL_OK")
</pallas_src>

<mosaic_0001>
module attributes {stable_mosaic.version = 11 : i64} {
  func.func @_transpose2d_kernel(%arg0: i32, %arg1: i32, %arg2: i32, %arg3: memref<1x16x32xf32, #tpu.memory_space<vmem>>, %arg4: memref<1x32x16xf32, #tpu.memory_space<vmem>>) attributes {dimension_semantics = [#tpu.dimension_semantics<parallel>, #tpu.dimension_semantics<parallel>, #tpu.dimension_semantics<parallel>], iteration_bounds = array<i64: 2, 1, 1>, scalar_prefetch = 0 : i64, scratch_operands = 0 : i64, tpu.core_type = #tpu.core_type<tc>, window_params = [{transform_indices = @transform_0, window_bounds = array<i64: 1, 16, 32>}, {transform_indices = @transform_1, window_bounds = array<i64: 1, 32, 16>}]} {
    %c0 = arith.constant 0 : index
    %c0_0 = arith.constant 0 : index
    %c0_1 = arith.constant 0 : index
    %0 = vector.load %arg3[%c0, %c0_0, %c0_1] : memref<1x16x32xf32, #tpu.memory_space<vmem>>, vector<1x16x32xf32>
    %1 = vector.shape_cast %0 : vector<1x16x32xf32> to vector<16x32xf32>
    %2 = tpu.transpose %1, [1, 0] : vector<16x32xf32> -> vector<32x16xf32>
    %c0_2 = arith.constant 0 : index
    %c0_3 = arith.constant 0 : index
    %c0_4 = arith.constant 0 : index
    %3 = vector.load %arg4[%c0_2, %c0_3, %c0_4] : memref<1x32x16xf32, #tpu.memory_space<vmem>>, vector<1x32x16xf32>
    %4 = vector.shape_cast %3 : vector<1x32x16xf32> to vector<32x16xf32>
    %5 = vector.shape_cast %2 : vector<32x16xf32> to vector<1x32x16xf32>
    tpu.vector_store %arg4[%c0_2, %c0_3, %c0_4], %5 {strides = array<i32>} : memref<1x32x16xf32, #tpu.memory_space<vmem>>, vector<1x32x16xf32>,
    return
  }
  func.func @transform_0(%arg0: i32, %arg1: i32, %arg2: i32) -> (i32, i32, i32) {
    %c0_i32 = arith.constant 0 : i32
    return %arg0, %arg2, %arg1 : i32, i32, i32
  }
  func.func @transform_1(%arg0: i32, %arg1: i32, %arg2: i32) -> (i32, i32, i32) {
    %c0_i32 = arith.constant 0 : i32
    return %arg0, %arg1, %arg2 : i32, i32, i32
  }
}

</mosaic_0001>

<llo_original>
// kernel: tpu_custom_call.1
$region0: #{tpu_custom_call.1}
  #allocation0 [shape = 'u32[]', space=smem, size = 0x4, offset = 0x4, fixed_abs, tag = 'smem constant byte address 0x4 - core index']
  #allocation1 [shape = 'u32[144,128]{1,0:T(1,128)}', space=vmem, size = 0x12000, scoped, tag = 'internal scratch']
  %s0 = inlined_call_operand.hbm [shape: f32[2,16,32], index: 0, kind: input, shape index: {}]
  %s1 = inlined_call_operand.vmem [shape: f32[2,32,16], index: 1, kind: output, shape index: {}]
  %s2 = sld [smem:[#allocation0]]
  $region41: #{tpu_custom_call.1} parent=0
    _
  %s4 = ssub.s32 1, %s2
  %s5 = scalar_select 0, %s4, %s2
  $region1: #{tpu_custom_call.1} parent=0
    #allocation2 [shape = 'u8[16384]{0}', space=vmem, size = 0x4000, scoped, tag = 'input window, operand 0']
    #allocation3 [shape = 's32[2]{0}', space=sflag, size = 0x8, scoped, tag = 'scoped memory for tpu_custom_call.1']
    %6 = vsyncpa [#allocation3], 0
    %s7 = scalar_lea.sflag [#allocation3], 1
    %8 = vsyncpa %s7, 0
    loop: start=0, step=1, limit=4
    $region2: #{tpu_custom_call.1} parent=1 // loop_pre_header
      _
    $region3: #{tpu_custom_call.1} parent=1 // loop_header
      %s10 = sphi 0, %s14
      %p11 = scmp.ge.s32.totalorder %s10, 4
      %s17 = sphi 0, %s36
      %s18 = sphi 0, %s32
      %s19 = sphi 0, %s28
      %s20 = sphi 0, %s17
      %s21 = sphi 0, %s18
      %s22 = sphi 0, %s19
      %s23 = sphi 0, %s20
      %s24 = sphi 0, %s21
      %s25 = sphi 0, %s22
      %s43 = sphi 0, %s45
      %s46 = sphi 0, %s43
      %s47 = sphi 0, %s46
      %s63 = sphi 0, %s47
      %s73 = sphi 0, %s75
      %s76 = sphi 0, %s73
      %s77 = sphi 0, %s76
      %s93 = sphi 0, %s77
    $region4: #{tpu_custom_call.1} parent=1 // loop_header_branch
      %13 = sbr.rel (%p11) target = $region8
    $region5: #{tpu_custom_call.1} parent=1 // loop_body
      %s15 = ssub.s32 %s10, 1
      %s16 = ssub.s32 %s10, 2
      %s26 = sadd.s32 1, %s19
      %p27 = scmp.ge.s32.totalorder %s26, 1
      %s28 = scalar_select %p27, 0, %s26
      %s29 = sadd.s32 1, %s18
      %s30 = scalar_select %p27, %s29, %s18
      %p31 = scmp.ge.s32.totalorder %s30, 1
      %s32 = scalar_select %p31, 0, %s30
      %s33 = sadd.s32 1, %s17
      %s34 = scalar_select %p31, %s33, %s17
      %p35 = scmp.ge.s32.totalorder %s34, 2
      %s36 = scalar_select %p35, 0, %s34
      %s37 = ssub.s32 %s17, %s36
      %s38 = ssub.s32 %s19, %s28
      %s39 = sor.u32 %s37, %s38
      %s40 = ssub.s32 %s18, %s32
      %s41 = sor.u32 %s39, %s40
      %p42 = scmp.eq.s32.totalorder %s41, 0
      %s44 = sadd.s32 %s43, 1
      %s45 = scalar_select %p42, %s43, %s44
      %p48 = pneg %p42
      %p49 = scmp.eq.s32.totalorder %s10, 1
      %p50 = por %p48, %p49
      %p51 = scmp.ne.s32.totalorder %s43, %s46
      %p52 = scmp.eq.s32.totalorder %s10, 0
      %p53 = por %p51, %p52
      %p54 = scmp.ne.s32.totalorder %s43, %s46
      %p55 = scmp.eq.s32.totalorder %s15, 1
      %p56 = por %p54, %p55
      %p57 = scmp.ne.s32.totalorder %s46, %s47
      %p58 = scmp.eq.s32.totalorder %s15, 0
      %p59 = por %p57, %p58
      %p60 = scmp.ne.s32.totalorder %s46, %s47
      %p61 = scmp.eq.s32.totalorder %s16, 1
      %p62 = por %p60, %p61
      %p64 = scmp.ne.s32.totalorder %s47, %s63
      %p65 = scmp.eq.s32.totalorder %s16, 0
      %p66 = por %p64, %p65
      %s67 = ssub.s32 %s17, %s36
      %s68 = ssub.s32 %s18, %s32
      %s69 = sor.u32 %s67, %s68
      %s70 = ssub.s32 %s19, %s28
      %s71 = sor.u32 %s69, %s70
      %p72 = scmp.eq.s32.totalorder %s71, 0
      %s74 = sadd.s32 %s73, 1
      %s75 = scalar_select %p72, %s73, %s74
      %p78 = pneg %p72
      %p79 = scmp.eq.s32.totalorder %s10, 1
      %p80 = por %p78, %p79
      %p81 = scmp.ne.s32.totalorder %s73, %s76
      %p82 = scmp.eq.s32.totalorder %s10, 0
      %p83 = por %p81, %p82
      %p84 = scmp.ne.s32.totalorder %s73, %s76
      %p85 = scmp.eq.s32.totalorder %s15, 1
      %p86 = por %p84, %p85
      %p87 = scmp.ne.s32.totalorder %s76, %s77
      %p88 = scmp.eq.s32.totalorder %s15, 0
      %p89 = por %p87, %p88
      %p90 = scmp.ne.s32.totalorder %s76, %s77
      %p91 = scmp.eq.s32.totalorder %s16, 1
      %p92 = por %p90, %p91
      %p94 = scmp.ne.s32.totalorder %s77, %s93
      %p95 = scmp.eq.s32.totalorder %s16, 0
      %p96 = por %p94, %p95
      %p97 = scmp.le.s32.totalorder 1, %s10
      %p98 = scmp.lt.s32.totalorder %s10, 3
      %p99 = pnand %p97, %p98
      %p100 = pneg %p99
      // Predicated region
      $region9: #{tpu_custom_call.1} parent=5 // pred_check
        _
      $region10: #{tpu_custom_call.1} parent=5 // pred_check_branch
        %102 = sbr.rel (%p99) target = $region12
      $region11: #{tpu_custom_call.1} parent=5 // pred_region
        %s103 = ssub.s32 %s10, 1
      $region12: #{tpu_custom_call.1} parent=5 // pred_fallthru
        _
      %p104 = scmp.lt.s32.totalorder %s10, 2
      // Predicated region
      $region13: #{tpu_custom_call.1} parent=5 // pred_check
        %p105 = pneg %p104
      $region14: #{tpu_custom_call.1} parent=5 // pred_check_branch
        %107 = sbr.rel (%p105) target = $region16
      $region15: #{tpu_custom_call.1} parent=5 // pred_region
        // Predicated region
        $region17: #{tpu_custom_call.1} parent=15 // pred_check
          %p108 = pneg %p53
        $region18: #{tpu_custom_call.1} parent=15 // pred_check_branch
          %110 = sbr.rel (%p108) target = $region20
        $region19: #{tpu_custom_call.1} parent=15 // pred_region
          %s111 = sand.u32 %s43, 1
          %s112 = scalar_lea.sflag [#allocation3], %s111
          %s113 = sand.u32 %s43, 1
          %s114 = smul.addr %s113, 16
          %s115 = scalar_lea.vmem [#allocation2], %s114
          %s116 = smul.u32 2, %s19
          %s118 = ssub.s32 256, 256
          %119 = vsyncadd %s112, %s118
          %s120 = sadd.s32 %s18, %s116
          %s121 = smul.addr %s17, 2
          %s122 = sadd.s32 %s120, %s121
          %s123 = smul.addr %s122, 128
          %s124 = scalar_lea.hbm %s0, %s123
          %s125 = sshll.u32 %s115, 4
          %s126 = int_to_ptr.vmem [resolvable:$true] %s125
          %131 = dma.hbm_to_vmem [thread:$0]  %s124, 256, %s126, %s112, 128, 128, 8
        $region20: #{tpu_custom_call.1} parent=15 // pred_fallthru
          _
      $region16: #{tpu_custom_call.1} parent=5 // pred_fallthru
        _
      %p132 = scmp.le.s32.totalorder 1, %s10
      %p133 = scmp.lt.s32.totalorder %s10, 3
      %p134 = pnand %p132, %p133
      %p135 = pneg %p134
      // Predicated region
      $region21: #{tpu_custom_call.1} parent=5 // pred_check
        _
      $region22: #{tpu_custom_call.1} parent=5 // pred_check_branch
        %137 = sbr.rel (%p134) target = $region24
      $region23: #{tpu_custom_call.1} parent=5 // pred_region
        %s138 = ssub.s32 %s10, 1
        %s139 = sand.u32 %s46, 1
        %s140 = scalar_lea.sflag [#allocation3], %s139
        %s141 = sand.u32 %s46, 1
        %s142 = smul.addr %s141, 16
        %s143 = scalar_lea.vmem [#allocation2], %s142
        // Predicated region
        $region25: #{tpu_custom_call.1} parent=23 // pred_check
          %p144 = pneg %p59
        $region26: #{tpu_custom_call.1} parent=23 // pred_check_branch
          %146 = sbr.rel (%p144) target = $region28
        $region27: #{tpu_custom_call.1} parent=23 // pred_region
          %147 = dma.done %s140, 256
        $region28: #{tpu_custom_call.1} parent=23 // pred_fallthru
          _
        %s148 = sand.u32 %s46, 1
        %s149 = scalar_lea.sflag [#allocation3], %s148
        %s150 = sand.u32 %s46, 1
        %s151 = smul.addr %s150, 16
        %s152 = scalar_lea.vmem [#allocation2], %s151
        %p153 = pneg %p59
        %p154 = pneg %p56
        %p155 = pneg %p89
        %p156 = pneg %p86
        %s157 = smul.u32 4, %s21
        %p158 = scmp.lt.s32.totalorder %s20, 1
        %s159 = scalar_select %p158, %s20, 1
        %p160 = scmp.lt.s32.totalorder %s157, 3
        %s161 = scalar_select %p160, %s157, 3
        %p162 = scmp.lt.s32.totalorder %s22, 0
        %s163 = scalar_select %p162, %s22, 0
        %s164 = sadd.s32 %s163, %s161
        %s165 = smul.addr %s159, 4
        %s166 = sadd.s32 %s164, %s165
        %s167 = smul.addr %s166, 8
        %s168 = scalar_lea.vmem %s1, %s167
        %s169 = smul.u32 2, %s22
        %s170 = smul.u32 4, %s21
        %p171 = scmp.lt.s32.totalorder %s20, 1
        %s172 = scalar_select %p171, %s20, 1
        %p173 = scmp.lt.s32.totalorder %s170, 3
        %s174 = scalar_select %p173, %s170, 3
        %p175 = scmp.lt.s32.totalorder %s22, 0
        %s176 = scalar_select %p175, %s22, 0
        %s177 = sadd.s32 %s176, %s174
        %s178 = smul.addr %s172, 4
        %s179 = sadd.s32 %s177, %s178
        %s180 = smul.addr %s179, 8
        %s181 = scalar_lea.vmem %s1, %s180
        %s182 = smul.u32 4, %s21
        %v183 = vld [vmem:[%s143] sm:$0xff]
        %v184 = vld [vmem:[%s143 + $0x8] sm:$0xff]
        %185 = vxpose.xlu0.b32.start [1/16] %v183, 128
        %186 = vxpose.xlu0.b32.cont [2/16] %v184, 128
        %187 = vxpose.xlu0.b32.cont [3/16] 0.0, 128
        %188 = vxpose.xlu0.b32.cont [4/16] 0.0, 128
        %189 = vxpose.xlu0.b32.cont [5/16] 0.0, 128
        %190 = vxpose.xlu0.b32.cont [6/16] 0.0, 128
        %191 = vxpose.xlu0.b32.cont [7/16] 0.0, 128
        %192 = vxpose.xlu0.b32.cont [8/16] 0.0, 128
        %193 = vxpose.xlu0.b32.cont [9/16] 0.0, 128
        %194 = vxpose.xlu0.b32.cont [10/16] 0.0, 128
        %195 = vxpose.xlu0.b32.cont [11/16] 0.0, 128
        %196 = vxpose.xlu0.b32.cont [12/16] 0.0, 128
        %197 = vxpose.xlu0.b32.cont [13/16] 0.0, 128
        %198 = vxpose.xlu0.b32.cont [14/16] 0.0, 128
        %199 = vxpose.xlu0.b32.cont [15/16] 0.0, 128
        %200 = vxpose.xlu0.b32.end [16/16] 0.0, 128
        %v201 = vpop.trf.xlu0
        %v202 = vpop.trf.xlu0
        %v203 = vpop.trf.xlu0
        %v204 = vpop.trf.xlu0
        %v205 = vpop.trf.xlu0
        %v206 = vpop.trf.xlu0
        %v207 = vpop.trf.xlu0
        %v208 = vpop.trf.xlu0
        %v209 = vpop.trf.xlu0
        %v210 = vpop.trf.xlu0
        %v211 = vpop.trf.xlu0
        %v212 = vpop.trf.xlu0
        %v213 = vpop.trf.xlu0
        %v214 = vpop.trf.xlu0
        %v215 = vpop.trf.xlu0
        %v216 = vpop.trf.xlu0
        %vm217 = vcmask 130048
        %218 = vst.msk [vmem:[%s181] sm:$0xff] %vm217, %v201
        %219 = vst.msk [vmem:[%s181 + $0x8] sm:$0xff] %vm217, %v202
        %220 = vst.msk [vmem:[%s181 + $0x10] sm:$0xff] %vm217, %v203
        %221 = vst.msk [vmem:[%s181 + $0x18] sm:$0xff] %vm217, %v204
        %s222 = smul.u32 4, %s21
        %p223 = scmp.lt.s32.totalorder %s20, 1
        %s224 = scalar_select %p223, %s20, 1
        %p225 = scmp.lt.s32.totalorder %s222, 3
        %s226 = scalar_select %p225, %s222, 3
        %p227 = scmp.lt.s32.totalorder %s22, 0
        %s228 = scalar_select %p227, %s22, 0
        %s229 = sadd.s32 %s228, %s226
        %s230 = smul.addr %s224, 4
        %s231 = sadd.s32 %s229, %s230
        %s232 = smul.addr %s231, 8
        %s233 = scalar_lea.vmem %s1, %s232
        // Predicated region
        $region29: #{tpu_custom_call.1} parent=23 // pred_check
          %p234 = pneg %p86
        $region30: #{tpu_custom_call.1} parent=23 // pred_check_branch
          %236 = sbr.rel (%p234) target = $region32
        $region31: #{tpu_custom_call.1} parent=23 // pred_region
          %s237 = smul.u32 4, %s21
        $region32: #{tpu_custom_call.1} parent=23 // pred_fallthru
          _
      $region24: #{tpu_custom_call.1} parent=5 // pred_fallthru
        _
      %p238 = scmp.le.s32.totalorder 2, %s10
      // Predicated region
      $region33: #{tpu_custom_call.1} parent=5 // pred_check
        %p239 = pneg %p238
      $region34: #{tpu_custom_call.1} parent=5 // pred_check_branch
        %241 = sbr.rel (%p239) target = $region36
      $region35: #{tpu_custom_call.1} parent=5 // pred_region
        %s242 = ssub.s32 %s10, 2
        // Predicated region
        $region37: #{tpu_custom_call.1} parent=35 // pred_check
          %p243 = pneg %p92
        $region38: #{tpu_custom_call.1} parent=35 // pred_check_branch
          %245 = sbr.rel (%p243) target = $region40
        $region39: #{tpu_custom_call.1} parent=35 // pred_region
          %s246 = smul.u32 4, %s24
          %p247 = scmp.lt.s32.totalorder %s23, 1
          %s248 = scalar_select %p247, %s23, 1
          %p249 = scmp.lt.s32.totalorder %s246, 3
          %s250 = scalar_select %p249, %s246, 3
          %p251 = scmp.lt.s32.totalorder %s25, 0
          %s252 = scalar_select %p251, %s25, 0
          %s253 = sadd.s32 %s252, %s250
          %s254 = smul.addr %s248, 4
          %s255 = sadd.s32 %s253, %s254
          %s256 = smul.addr %s255, 8
          %s257 = scalar_lea.vmem %s1, %s256
        $region40: #{tpu_custom_call.1} parent=35 // pred_fallthru
          _
      $region36: #{tpu_custom_call.1} parent=5 // pred_fallthru
        _
    $region6: #{tpu_custom_call.1} parent=1 // loop_footer
      %s14 = sadd.s32 1, %s10
    $region7: #{tpu_custom_call.1} parent=1 // loop_footer_branch
      %9 = sbr.rel target = $region3
    $region8: #{tpu_custom_call.1} parent=1 // loop_exit
      _
    %258 = vsyncpa [#allocation3], 1
    %s259 = scalar_lea.sflag [#allocation3], 1
    %260 = vsyncpa %s259, 1

</llo_original>
